<compile_context>
chip_gen: v7x
topology: tpu7x:2x2x1
jax: 0.10.0
libtpu: 0.0.40
codegen_flags: <defaults>
</compile_context>

<pallas_src>
import jax
import jax.numpy as jnp
from jax.experimental import pallas as pl
from jax.experimental.pallas import tpu as pltpu

LANE = 128      # TPU lane width; hidden/head dims padded to this.
HIDDEN = 64     # module hidden size (pre-padding)


def _round_up(x, m):
    return ((x + m - 1) // m) * m


# ----------------------------- kernel ---------------------------------------

def actor_critic_kernel(obs_ref, w1_ref, b1_ref, w2_ref, b2_ref,
                        wh_ref, bh_ref, mean_ref, value_ref):
    # obs_ref  : (TB, obs_dim) f32
    # w1_ref   : (obs_dim, 128) f32 ; w2_ref/wh_ref: (128, 128) f32
    # b*_ref   : (1, 128) f32
    # mean_ref : (TB, A) f32 ; value_ref: (TB, 1) f32
    x = obs_ref[...]
    h1 = jnp.tanh(
        jnp.dot(x, w1_ref[...], preferred_element_type=jnp.float32) + b1_ref[...]
    )
    h2 = jnp.tanh(
        jnp.dot(h1, w2_ref[...], preferred_element_type=jnp.float32) + b2_ref[...]
    )
    head = (
        jnp.dot(h2, wh_ref[...], preferred_element_type=jnp.float32) + bh_ref[...]
    )
    a = mean_ref.shape[-1]
    mean_ref[...] = head[:, :a]
    value_ref[...] = head[:, a:a + 1]


# ----------------------------- wrapper ---------------------------------------

def prepare_params(params):
    """Pad hidden/head dims to 128 lanes, fuse actor+critic heads (f32)."""
    obs_dim, hidden = params["w1"].shape
    action_dim = params["wa"].shape[1]
    assert hidden <= LANE and action_dim + 1 <= LANE

    def pad_cols(w, cols):
        out = jnp.zeros((w.shape[0], cols), jnp.float32)
        return out.at[:, : w.shape[1]].set(w.astype(jnp.float32))

    def pad2(w, rows, cols):
        out = jnp.zeros((rows, cols), jnp.float32)
        return out.at[: w.shape[0], : w.shape[1]].set(w.astype(jnp.float32))

    w1 = pad_cols(params["w1"], LANE)                                 # (obs_dim, 128)
    w2 = pad2(params["w2"], LANE, LANE)                               # (128, 128)
    wh = pad2(jnp.concatenate([params["wa"], params["wc"]], axis=1),  # (128, 128)
              LANE, LANE)
    b1 = pad_cols(params["b1"], LANE)                                 # (1, 128)
    b2 = pad_cols(params["b2"], LANE)
    bh = pad_cols(jnp.concatenate([params["ba"], params["bc"]], axis=1), LANE)

    return {"w1": w1, "b1": b1, "w2": w2, "b2": b2, "wh": wh, "bh": bh,
            "obs_dim": obs_dim, "action_dim": action_dim}


def _choose_batch_tile(batch):
    """Large batch tiles (per-step overhead ~0.35us, per-row VMEM is tiny),
    but keep >= 2 grid steps when the batch allows so the 'parallel' axis
    can shard across v7x's 2 TensorCores."""
    bp = _round_up(max(batch, 1), 8)
    if bp < 512:
        return bp                                   # single block; launch-bound anyway
    return min(2048, _round_up(pl.cdiv(bp, 2), 128))


def actor_critic_forward(obs, prepared):
    """obs: (B, obs_dim) float32. Returns (mean (B, A), value (B, 1)) float32."""
    B, obs_dim = obs.shape
    assert obs_dim == prepared["obs_dim"]
    A = prepared["action_dim"]
    obs = obs.astype(jnp.float32)

    TB = _choose_batch_tile(B)
    grid = (pl.cdiv(B, TB),)

    obs_spec = pl.BlockSpec((TB, obs_dim), lambda i: (i, 0))      # streamed rows
    w1_spec = pl.BlockSpec((obs_dim, LANE), lambda i: (0, 0))     # VMEM-resident
    w_spec = pl.BlockSpec((LANE, LANE), lambda i: (0, 0))
    b_spec = pl.BlockSpec((1, LANE), lambda i: (0, 0))
    mean_spec = pl.BlockSpec((TB, A), lambda i: (i, 0))
    value_spec = pl.BlockSpec((TB, 1), lambda i: (i, 0))

    # Advisory cost for XLA scheduling around the custom call.
    flops = 2 * B * (obs_dim * LANE + LANE * LANE + LANE * LANE)
    transcendentals = 2 * B * LANE
    bytes_accessed = (B * obs_dim * 4                              # obs read
                      + (obs_dim * LANE + 2 * LANE * LANE + 3 * LANE) * 4  # weights
                      + B * (A + 1) * 4)                           # mean + value write
    cost = pl.CostEstimate(flops=flops, transcendentals=transcendentals,
                           bytes_accessed=bytes_accessed)

    mean, value = pl.pallas_call(
        actor_critic_kernel,
        out_shape=(jax.ShapeDtypeStruct((B, A), jnp.float32),
                   jax.ShapeDtypeStruct((B, 1), jnp.float32)),
        grid_spec=pltpu.PrefetchScalarGridSpec(
            num_scalar_prefetch=0,
            grid=grid,
            in_specs=[obs_spec, w1_spec, b_spec, w_spec, b_spec, w_spec, b_spec],
            out_specs=(mean_spec, value_spec),
        ),
        compiler_params=pltpu.CompilerParams(
            dimension_semantics=("parallel",)),
        cost_estimate=cost,
    )(obs, prepared["w1"], prepared["b1"], prepared["w2"], prepared["b2"],
      prepared["wh"], prepared["bh"])

    return mean, value


# ----------------------------- init / reference ------------------------------

def init_params(key, obs_dim, action_dim, hidden=HIDDEN):
    """PyTorch-Linear-style init; weights stored as (in_features, out_features)."""
    def linear(key, fan_in, fan_out):
        kw, kb = jax.random.split(key)
        bound = 1.0 / jnp.sqrt(fan_in)
        w = jax.random.uniform(kw, (fan_in, fan_out), jnp.float32, -bound, bound)
        b = jax.random.uniform(kb, (1, fan_out), jnp.float32, -bound, bound)
        return w, b

    k1, k2, k3, k4 = jax.random.split(key, 4)
    w1, b1 = linear(k1, obs_dim, hidden)
    w2, b2 = linear(k2, hidden, hidden)
    wa, ba = linear(k3, hidden, action_dim)
    wc, bc = linear(k4, hidden, 1)
    # log_std is used only in act()/evaluate(), not forward(); kept for parity.
    log_std = jnp.zeros((action_dim,), jnp.float32)
    return {"w1": w1, "b1": b1, "w2": w2, "b2": b2,
            "wa": wa, "ba": ba, "wc": wc, "bc": bc, "log_std": log_std}


def reference_forward(obs, p):
    h1 = jnp.tanh(obs @ p["w1"] + p["b1"])
    h2 = jnp.tanh(h1 @ p["w2"] + p["b2"])
    return h2 @ p["wa"] + p["ba"], h2 @ p["wc"] + p["bc"]


# ----------------------------- main -------------------------------------------

if __name__ == "__main__":
    # Small shapes consistent with an Ant-v5-style ActorCritic MLP.
    batch, obs_dim, action_dim = 8, 32, 8

    key = jax.random.PRNGKey(0)
    k_params, k_obs = jax.random.split(key)
    params = init_params(k_params, obs_dim, action_dim)
    prepared = prepare_params(params)
    obs = jax.random.normal(k_obs, (batch, obs_dim), jnp.float32)

    mean, value = actor_critic_forward(obs, prepared)
    jax.block_until_ready((mean, value))

    ref_mean, ref_value = reference_forward(obs, params)
    assert mean.shape == (batch, action_dim)
    assert value.shape == (batch, 1)
    # All-f32 path: typical error is far tighter; tolerance kept loose only to
    # stay robust to whatever MXU precision the default f32 matmul lowers to.
    assert jnp.allclose(mean, ref_mean, atol=2e-2, rtol=2e-2)
    assert jnp.allclose(value, ref_value, atol=2e-2, rtol=2e-2)

    print("KERNEL_OK")
</pallas_src>

<mosaic_0001>
module attributes {stable_mosaic.version = 11 : i64} {
  func.func @actor_critic_kernel(%arg0: i32, %arg1: memref<8x32xf32, #tpu.memory_space<vmem>>, %arg2: memref<32x128xf32, #tpu.memory_space<vmem>>, %arg3: memref<1x128xf32, #tpu.memory_space<vmem>>, %arg4: memref<128x128xf32, #tpu.memory_space<vmem>>, %arg5: memref<1x128xf32, #tpu.memory_space<vmem>>, %arg6: memref<128x128xf32, #tpu.memory_space<vmem>>, %arg7: memref<1x128xf32, #tpu.memory_space<vmem>>, %arg8: memref<8x8xf32, #tpu.memory_space<vmem>>, %arg9: memref<8x1xf32, #tpu.memory_space<vmem>>) attributes {dimension_semantics = [#tpu.dimension_semantics<parallel>], iteration_bounds = array<i64: 1>, scalar_prefetch = 0 : i64, scratch_operands = 0 : i64, tpu.core_type = #tpu.core_type<tc>, window_params = [{transform_indices = @transform_0, window_bounds = array<i64: 8, 32>}, {pipeline_mode = #tpu.pipeline_mode<synchronous>, transform_indices = @transform_1, window_bounds = array<i64: 32, 128>}, {pipeline_mode = #tpu.pipeline_mode<synchronous>, transform_indices = @transform_2, window_bounds = array<i64: 1, 128>}, {pipeline_mode = #tpu.pipeline_mode<synchronous>, transform_indices = @transform_3, window_bounds = array<i64: 128, 128>}, {pipeline_mode = #tpu.pipeline_mode<synchronous>, transform_indices = @transform_4, window_bounds = array<i64: 1, 128>}, {pipeline_mode = #tpu.pipeline_mode<synchronous>, transform_indices = @transform_5, window_bounds = array<i64: 128, 128>}, {pipeline_mode = #tpu.pipeline_mode<synchronous>, transform_indices = @transform_6, window_bounds = array<i64: 1, 128>}, {transform_indices = @transform_7, window_bounds = array<i64: 8, 8>}, {transform_indices = @transform_8, window_bounds = array<i64: 8, 1>}]} {
    %c0 = arith.constant 0 : index
    %c0_0 = arith.constant 0 : index
    %0 = vector.load %arg1[%c0, %c0_0] : memref<8x32xf32, #tpu.memory_space<vmem>>, vector<8x32xf32>
    %c0_1 = arith.constant 0 : index
    %c0_2 = arith.constant 0 : index
    %1 = vector.load %arg2[%c0_1, %c0_2] : memref<32x128xf32, #tpu.memory_space<vmem>>, vector<32x128xf32>
    %cst = arith.constant dense<0.000000e+00> : vector<8x128xf32>
    %2 = tpu.matmul %0, %1, %cst {dimension_numbers = #tpu.dot_dimension_numbers<[1], [0], [0], [1], [0, 0, 1, 1], [], []>} : vector<8x32xf32>, vector<32x128xf32>, vector<8x128xf32> -> vector<8x128xf32>
    %c0_3 = arith.constant 0 : index
    %c0_4 = arith.constant 0 : index
    %3 = vector.load %arg3[%c0_3, %c0_4] : memref<1x128xf32, #tpu.memory_space<vmem>>, vector<1x128xf32>
    %4 = vector.broadcast %3 : vector<1x128xf32> to vector<8x128xf32>
    %5 = arith.addf %2, %4 : vector<8x128xf32>
    %6 = math.tanh %5 : vector<8x128xf32>
    %c0_5 = arith.constant 0 : index
    %c0_6 = arith.constant 0 : index
    %7 = vector.load %arg4[%c0_5, %c0_6] : memref<128x128xf32, #tpu.memory_space<vmem>>, vector<128x128xf32>
    %cst_7 = arith.constant dense<0.000000e+00> : vector<8x128xf32>
    %8 = tpu.matmul %6, %7, %cst_7 {dimension_numbers = #tpu.dot_dimension_numbers<[1], [0], [0], [1], [0, 0, 1, 1], [], []>} : vector<8x128xf32>, vector<128x128xf32>, vector<8x128xf32> -> vector<8x128xf32>
    %c0_8 = arith.constant 0 : index
    %c0_9 = arith.constant 0 : index
    %9 = vector.load %arg5[%c0_8, %c0_9] : memref<1x128xf32, #tpu.memory_space<vmem>>, vector<1x128xf32>
    %10 = vector.broadcast %9 : vector<1x128xf32> to vector<8x128xf32>
    %11 = arith.addf %8, %10 : vector<8x128xf32>
    %12 = math.tanh %11 : vector<8x128xf32>
    %c0_10 = arith.constant 0 : index
    %c0_11 = arith.constant 0 : index
    %13 = vector.load %arg6[%c0_10, %c0_11] : memref<128x128xf32, #tpu.memory_space<vmem>>, vector<128x128xf32>
    %cst_12 = arith.constant dense<0.000000e+00> : vector<8x128xf32>
    %14 = tpu.matmul %12, %13, %cst_12 {dimension_numbers = #tpu.dot_dimension_numbers<[1], [0], [0], [1], [0, 0, 1, 1], [], []>} : vector<8x128xf32>, vector<128x128xf32>, vector<8x128xf32> -> vector<8x128xf32>
    %c0_13 = arith.constant 0 : index
    %c0_14 = arith.constant 0 : index
    %15 = vector.load %arg7[%c0_13, %c0_14] : memref<1x128xf32, #tpu.memory_space<vmem>>, vector<1x128xf32>
    %16 = vector.broadcast %15 : vector<1x128xf32> to vector<8x128xf32>
    %17 = arith.addf %14, %16 : vector<8x128xf32>
    %18 = vector.extract_strided_slice %17 {offsets = [0, 0], sizes = [8, 8], strides = [1, 1]} : vector<8x128xf32> to vector<8x8xf32>
    %c0_15 = arith.constant 0 : index
    %c0_16 = arith.constant 0 : index
    %19 = vector.load %arg8[%c0_15, %c0_16] : memref<8x8xf32, #tpu.memory_space<vmem>>, vector<8x8xf32>
    tpu.vector_store %arg8[%c0_15, %c0_16], %18 {strides = array<i32>} : memref<8x8xf32, #tpu.memory_space<vmem>>, vector<8x8xf32>,
    %20 = vector.extract_strided_slice %17 {offsets = [0, 8], sizes = [8, 1], strides = [1, 1]} : vector<8x128xf32> to vector<8x1xf32>
    %c0_17 = arith.constant 0 : index
    %c0_18 = arith.constant 0 : index
    %21 = vector.load %arg9[%c0_17, %c0_18] : memref<8x1xf32, #tpu.memory_space<vmem>>, vector<8x1xf32>
    tpu.vector_store %arg9[%c0_17, %c0_18], %20 {strides = array<i32>} : memref<8x1xf32, #tpu.memory_space<vmem>>, vector<8x1xf32>,
    return
  }
  func.func @transform_0(%arg0: i32) -> (i32, i32) {
    %c0_i32 = arith.constant 0 : i32
    %c0_i32_0 = arith.constant 0 : i32
    return %arg0, %c0_i32 : i32, i32
  }
  func.func @transform_1(%arg0: i32) -> (i32, i32) {
    %c0_i32 = arith.constant 0 : i32
    %c0_i32_0 = arith.constant 0 : i32
    %c0_i32_1 = arith.constant 0 : i32
    return %c0_i32, %c0_i32_0 : i32, i32
  }
  func.func @transform_2(%arg0: i32) -> (i32, i32) {
    %c0_i32 = arith.constant 0 : i32
    %c0_i32_0 = arith.constant 0 : i32
    %c0_i32_1 = arith.constant 0 : i32
    return %c0_i32, %c0_i32_0 : i32, i32
  }
  func.func @transform_3(%arg0: i32) -> (i32, i32) {
    %c0_i32 = arith.constant 0 : i32
    %c0_i32_0 = arith.constant 0 : i32
    %c0_i32_1 = arith.constant 0 : i32
    return %c0_i32, %c0_i32_0 : i32, i32
  }
  func.func @transform_4(%arg0: i32) -> (i32, i32) {
    %c0_i32 = arith.constant 0 : i32
    %c0_i32_0 = arith.constant 0 : i32
    %c0_i32_1 = arith.constant 0 : i32
    return %c0_i32, %c0_i32_0 : i32, i32
  }
  func.func @transform_5(%arg0: i32) -> (i32, i32) {
    %c0_i32 = arith.constant 0 : i32
    %c0_i32_0 = arith.constant 0 : i32
    %c0_i32_1 = arith.constant 0 : i32
    return %c0_i32, %c0_i32_0 : i32, i32
  }
  func.func @transform_6(%arg0: i32) -> (i32, i32) {
    %c0_i32 = arith.constant 0 : i32
    %c0_i32_0 = arith.constant 0 : i32
    %c0_i32_1 = arith.constant 0 : i32
    return %c0_i32, %c0_i32_0 : i32, i32
  }
  func.func @transform_7(%arg0: i32) -> (i32, i32) {
    %c0_i32 = arith.constant 0 : i32
    %c0_i32_0 = arith.constant 0 : i32
    return %arg0, %c0_i32 : i32, i32
  }
  func.func @transform_8(%arg0: i32) -> (i32, i32) {
    %c0_i32 = arith.constant 0 : i32
    %c0_i32_0 = arith.constant 0 : i32
    return %arg0, %c0_i32 : i32, i32
  }
}

</mosaic_0001>

<llo_original>
// kernel: tpu_custom_call.1
$region0: #{tpu_custom_call.1}
  #allocation0 [shape = 'u32[]', space=smem, size = 0x4, offset = 0x4, fixed_abs, tag = 'smem constant byte address 0x4 - core index']
  #allocation1 [shape = 'u32[144,128]{1,0:T(1,128)}', space=vmem, size = 0x12000, scoped, tag = 'internal scratch']
  %s0 = inlined_call_operand.hbm [shape: f32[8,32], index: 0, kind: input, shape index: {}]
  %s1 = inlined_call_operand.hbm [shape: f32[32,128], index: 1, kind: input, shape index: {}]
  %s2 = inlined_call_operand.vmem [shape: f32[1,128], index: 2, kind: input, shape index: {}]
  %s3 = inlined_call_operand.hbm [shape: f32[128,128], index: 3, kind: input, shape index: {}]
  %s4 = inlined_call_operand.vmem [shape: f32[1,128], index: 4, kind: input, shape index: {}]
  %s5 = inlined_call_operand.hbm [shape: f32[128,128], index: 5, kind: input, shape index: {}]
  %s6 = inlined_call_operand.vmem [shape: f32[1,128], index: 6, kind: input, shape index: {}]
  %s7 = inlined_call_operand.hbm [shape: f32[8,8], index: 7, kind: output, shape index: {0}]
  %s8 = inlined_call_operand.vmem [shape: f32[8,1], index: 8, kind: output, shape index: {1}]
  %9 = xla_tuple %s7, %s8
  %s10 = sld [smem:[#allocation0]]
  $region62: #{tpu_custom_call.1} parent=0
    _
  %s12 = ssub.s32 1, %s10
  %s13 = scalar_select 0, %s12, %s10
  $region1: #{tpu_custom_call.1} parent=0
    #allocation2 [shape = 'u8[4096]{0}', space=vmem, size = 0x1000, scoped, tag = 'input window, operand 0, single buffered']
    #allocation3 [shape = 's32[1]{0}', space=sflag, size = 0x4, scoped, tag = 'scoped memory for tpu_custom_call.1']
    #allocation4 [shape = 's32[1]{0}', space=sflag, size = 0x4, scoped, tag = 'scoped memory for tpu_custom_call.1']
    #allocation5 [shape = 'u8[16384]{0}', space=vmem, size = 0x4000, scoped, tag = 'input window, operand 1, single buffered']
    #allocation6 [shape = 's32[1]{0}', space=sflag, size = 0x4, scoped, tag = 'scoped memory for tpu_custom_call.1']
    #allocation7 [shape = 'u8[65536]{0}', space=vmem, size = 0x10000, scoped, tag = 'input window, operand 3, single buffered']
    #allocation8 [shape = 'u8[65536]{0}', space=vmem, size = 0x10000, scoped, tag = 'input window, operand 5, single buffered']
    #allocation9 [shape = 's32[1]{0}', space=sflag, size = 0x4, scoped, tag = 'scoped memory for tpu_custom_call.1']
    #allocation10 [shape = 'u8[4096]{0}', space=vmem, size = 0x1000, scoped, tag = 'output window, operand 0, single buffered']
    %14 = vsyncpa [#allocation3], 0
    %15 = vsyncpa [#allocation6], 0
    %16 = vsyncpa [#allocation9], 0
    %17 = vsyncpa [#allocation4], 0
    // Predicated region
    $region2: #{tpu_custom_call.1} parent=1 // pred_check
      _
    $region3: #{tpu_custom_call.1} parent=1 // pred_check_branch
      %19 = sbr.rel (0) target = $region5
    $region4: #{tpu_custom_call.1} parent=1 // pred_region
      %s21 = ssub.s32 128, 128
      %22 = vsyncadd [#allocation3], %s21
      %s24 = sshll.u32 [#allocation2], 4
      %s25 = int_to_ptr.vmem [resolvable:$true] %s24
      %27 = dma.hbm_to_vmem [thread:$0]  %s0, 128, %s25, [#allocation3]
    $region5: #{tpu_custom_call.1} parent=1 // pred_fallthru
      _
    // Predicated region
    $region6: #{tpu_custom_call.1} parent=1 // pred_check
      _
    $region7: #{tpu_custom_call.1} parent=1 // pred_check_branch
      %29 = sbr.rel (0) target = $region9
    $region8: #{tpu_custom_call.1} parent=1 // pred_region
      %s31 = ssub.s32 512, 512
      %32 = vsyncadd [#allocation6], %s31
      %s33 = sshll.u32 [#allocation5], 4
      %s34 = int_to_ptr.vmem [resolvable:$true] %s33
      %39 = dma.hbm_to_vmem [thread:$0]  %s1, 512, %s34, [#allocation6], 128, 128, 8
    $region9: #{tpu_custom_call.1} parent=1 // pred_fallthru
      _
    // Predicated region
    $region10: #{tpu_custom_call.1} parent=1 // pred_check
      _
    $region11: #{tpu_custom_call.1} parent=1 // pred_check_branch
      %41 = sbr.rel (0) target = $region13
    $region12: #{tpu_custom_call.1} parent=1 // pred_region
      _
    $region13: #{tpu_custom_call.1} parent=1 // pred_fallthru
      _
    // Predicated region
    $region14: #{tpu_custom_call.1} parent=1 // pred_check
      _
    $region15: #{tpu_custom_call.1} parent=1 // pred_check_branch
      %43 = sbr.rel (0) target = $region17
    $region16: #{tpu_custom_call.1} parent=1 // pred_region
      %s45 = ssub.s32 2048, 2048
      %46 = vsyncadd [#allocation6], %s45
      %s47 = sshll.u32 [#allocation7], 4
      %s48 = int_to_ptr.vmem [resolvable:$true] %s47
      %53 = dma.hbm_to_vmem [thread:$0]  %s3, 2048, %s48, [#allocation6], 128, 128, 8
    $region17: #{tpu_custom_call.1} parent=1 // pred_fallthru
      _
    // Predicated region
    $region18: #{tpu_custom_call.1} parent=1 // pred_check
      _
    $region19: #{tpu_custom_call.1} parent=1 // pred_check_branch
      %55 = sbr.rel (0) target = $region21
    $region20: #{tpu_custom_call.1} parent=1 // pred_region
      _
    $region21: #{tpu_custom_call.1} parent=1 // pred_fallthru
      _
    // Predicated region
    $region22: #{tpu_custom_call.1} parent=1 // pred_check
      _
    $region23: #{tpu_custom_call.1} parent=1 // pred_check_branch
      %57 = sbr.rel (0) target = $region25
    $region24: #{tpu_custom_call.1} parent=1 // pred_region
      %s59 = ssub.s32 2048, 2048
      %60 = vsyncadd [#allocation9], %s59
      %s61 = sshll.u32 [#allocation8], 4
      %s62 = int_to_ptr.vmem [resolvable:$true] %s61
      %67 = dma.hbm_to_vmem [thread:$0]  %s5, 2048, %s62, [#allocation9], 128, 128, 8
    $region25: #{tpu_custom_call.1} parent=1 // pred_fallthru
      _
    // Predicated region
    $region26: #{tpu_custom_call.1} parent=1 // pred_check
      _
    $region27: #{tpu_custom_call.1} parent=1 // pred_check_branch
      %69 = sbr.rel (0) target = $region29
    $region28: #{tpu_custom_call.1} parent=1 // pred_region
      _
    $region29: #{tpu_custom_call.1} parent=1 // pred_fallthru
      _
    // Predicated region
    $region30: #{tpu_custom_call.1} parent=1 // pred_check
      _
    $region31: #{tpu_custom_call.1} parent=1 // pred_check_branch
      %71 = sbr.rel (0) target = $region33
    $region32: #{tpu_custom_call.1} parent=1 // pred_region
      %72 = dma.done [#allocation3], 128
    $region33: #{tpu_custom_call.1} parent=1 // pred_fallthru
      _
    // Predicated region
    $region34: #{tpu_custom_call.1} parent=1 // pred_check
      _
    $region35: #{tpu_custom_call.1} parent=1 // pred_check_branch
      %74 = sbr.rel (0) target = $region37
    $region36: #{tpu_custom_call.1} parent=1 // pred_region
      %75 = dma.done [#allocation6], 512
    $region37: #{tpu_custom_call.1} parent=1 // pred_fallthru
      _
    // Predicated region
    $region38: #{tpu_custom_call.1} parent=1 // pred_check
      _
    $region39: #{tpu_custom_call.1} parent=1 // pred_check_branch
      %77 = sbr.rel (0) target = $region41
    $region40: #{tpu_custom_call.1} parent=1 // pred_region
      %78 = dma.done [#allocation6], 2048
    $region41: #{tpu_custom_call.1} parent=1 // pred_fallthru
      _
    // Predicated region
    $region42: #{tpu_custom_call.1} parent=1 // pred_check
      _
    $region43: #{tpu_custom_call.1} parent=1 // pred_check_branch
      %80 = sbr.rel (0) target = $region45
    $region44: #{tpu_custom_call.1} parent=1 // pred_region
      %81 = dma.done [#allocation9], 2048
    $region45: #{tpu_custom_call.1} parent=1 // pred_fallthru
      _
    %v82 = vld [vmem:[#allocation2] sm:$0xff]
    %v83 = vld [vmem:[#allocation5] sm:$0xff]
    %v84 = vld [vmem:[#allocation5 + $0x8] sm:$0xff]
    %v85 = vld [vmem:[#allocation5 + $0x10] sm:$0xff]
    %v86 = vld [vmem:[#allocation5 + $0x18] sm:$0xff]
    %v87 = vld [vmem:[%s2] sm:$0x1]
    %v89 = vlaneseq
    %v90 = vshrl.u32 %v89, 7
    %v91 = vsub.s32 0, %v90
    %v92 = vrot.slane %v87, %v91
    %vm94 = vcmask 261120
    %v96 = vsel %vm94, %v82, 0
    %98 = vmatprep.subr.mxu0 0.0
    %99 = vmatpush1.msra.mxu0 %v83
    %100 = vmatprep.subr.mxu0 0.0
    %101 = vmatpush1.msra.mxu0 %v84
    %102 = vmatprep.subr.mxu0 0.0
    %103 = vmatpush1.msra.mxu0 %v85
    %104 = vmatprep.subr.mxu0 0.0
    %105 = vmatpush1.msra.mxu0 %v86
    %106 = vmatprep.subr.mxu0 0.0
    %107 = vmatpush1.msra.mxu0 0.0
    %108 = vmatprep.subr.mxu0 0.0
    %109 = vmatpush1.msra.mxu0 0.0
    %110 = vmatprep.subr.mxu0 0.0
    %111 = vmatpush1.msra.mxu0 0.0
    %112 = vmatprep.subr.mxu0 0.0
    %113 = vmatpush1.msra.mxu0 0.0
    %114 = vmatprep.subr.mxu0 0.0
    %115 = vmatpush1.msra.mxu0 0.0
    %116 = vmatprep.subr.mxu0 0.0
    %117 = vmatpush1.msra.mxu0 0.0
    %118 = vmatprep.subr.mxu0 0.0
    %119 = vmatpush1.msra.mxu0 0.0
    %120 = vmatprep.subr.mxu0 0.0
    %121 = vmatpush1.msra.mxu0 0.0
    %122 = vmatprep.subr.mxu0 0.0
    %123 = vmatpush1.msra.mxu0 0.0
    %124 = vmatprep.subr.mxu0 0.0
    %125 = vmatpush1.msra.mxu0 0.0
    %126 = vmatprep.subr.mxu0 0.0
    %127 = vmatpush1.msra.mxu0 0.0
    %128 = vmatprep.subr.mxu0 0.0
    %129 = vmatpush1.msra.mxu0 0.0
    %130 = vmatprep.subr.mxu0 0.0
    %131 = vmatpush1.msra.mxu0 0.0
    %132 = vmatprep.subr.mxu0 0.0
    %133 = vmatpush1.msra.mxu0 0.0
    %134 = vmatprep.subr.mxu0 0.0
    %135 = vmatpush1.msra.mxu0 0.0
    %136 = vmatprep.subr.mxu0 0.0
    %137 = vmatpush1.msra.mxu0 0.0
    %138 = vmatprep.subr.mxu0 0.0
    %139 = vmatpush1.msra.mxu0 0.0
    %140 = vmatprep.subr.mxu0 0.0
    %141 = vmatpush1.msra.mxu0 0.0
    %142 = vmatprep.subr.mxu0 0.0
    %143 = vmatpush1.msra.mxu0 0.0
    %144 = vmatprep.subr.mxu0 0.0
    %145 = vmatpush1.msra.mxu0 0.0
    %146 = vmatprep.subr.mxu0 0.0
    %147 = vmatpush1.msra.mxu0 0.0
    %148 = vmatprep.subr.mxu0 0.0
    %149 = vmatpush1.msra.mxu0 0.0
    %150 = vmatprep.subr.mxu0 0.0
    %151 = vmatpush1.msra.mxu0 0.0
    %152 = vmatprep.subr.mxu0 0.0
    %153 = vmatpush1.msra.mxu0 0.0
    %154 = vmatprep.subr.mxu0 0.0
    %155 = vmatpush1.msra.mxu0 0.0
    %156 = vmatprep.subr.mxu0 0.0
    %157 = vmatpush1.msra.mxu0 0.0
    %158 = vmatprep.subr.mxu0 0.0
    %159 = vmatpush1.msra.mxu0 0.0
    %160 = vmatprep.subr.mxu0 0.0
    %161 = vmatpush1.msra.mxu0 0.0
    %162 = vmatprep.mubr.f32.mxu0 0.0
    %163 = vmatmul.mubr.f32.gmra.mrb[0].mxu0 %v96
    %v164 = vpop.f32.mrb[0].mxu0
    %v165 = vadd.f32 %v92, %v164
    %v166 = vpop.f32.mrb[0].mxu0
    %167 = vdwg.mxu0
    %v168 = vtanh.pop %v165
    %v169 = vld [vmem:[#allocation7] sm:$0xff]
    %v170 = vld [vmem:[#allocation7 + $0x8] sm:$0xff]
    %v171 = vld [vmem:[#allocation7 + $0x10] sm:$0xff]
    %v172 = vld [vmem:[#allocation7 + $0x18] sm:$0xff]
    %v173 = vld [vmem:[#allocation7 + $0x20] sm:$0xff]
    %v174 = vld [vmem:[#allocation7 + $0x28] sm:$0xff]
    %v175 = vld [vmem:[#allocation7 + $0x30] sm:$0xff]
    %v176 = vld [vmem:[#allocation7 + $0x38] sm:$0xff]
    %v177 = vld [vmem:[#allocation7 + $0x40] sm:$0xff]
    %v178 = vld [vmem:[#allocation7 + $0x48] sm:$0xff]
    %v179 = vld [vmem:[#allocation7 + $0x50] sm:$0xff]
    %v180 = vld [vmem:[#allocation7 + $0x58] sm:$0xff]
    %v181 = vld [vmem:[#allocation7 + $0x60] sm:$0xff]
    %v182 = vld [vmem:[#allocation7 + $0x68] sm:$0xff]
    %v183 = vld [vmem:[#allocation7 + $0x70] sm:$0xff]
    %v184 = vld [vmem:[#allocation7 + $0x78] sm:$0xff]
    %v185 = vld [vmem:[%s4] sm:$0x1]
    %v187 = vlaneseq
    %v188 = vshrl.u32 %v187, 7
    %v189 = vsub.s32 0, %v188
    %v190 = vrot.slane %v185, %v189
    %192 = vmatprep.subr.mxu0 0.0
    %193 = vmatpush1.msra.mxu0 %v169
    %194 = vmatprep.subr.mxu0 0.0
    %195 = vmatpush1.msra.mxu0 %v170
    %196 = vmatprep.subr.mxu0 0.0
    %197 = vmatpush1.msra.mxu0 %v171
    %198 = vmatprep.subr.mxu0 0.0
    %199 = vmatpush1.msra.mxu0 %v172
    %200 = vmatprep.subr.mxu0 0.0
    %201 = vmatpush1.msra.mxu0 %v173
    %202 = vmatprep.subr.mxu0 0.0
    %203 = vmatpush1.msra.mxu0 %v174
    %204 = vmatprep.subr.mxu0 0.0
    %205 = vmatpush1.msra.mxu0 %v175
    %206 = vmatprep.subr.mxu0 0.0
    %207 = vmatpush1.msra.mxu0 %v176
    %208 = vmatprep.subr.mxu0 0.0
    %209 = vmatpush1.msra.mxu0 %v177
    %210 = vmatprep.subr.mxu0 0.0
    %211 = vmatpush1.msra.mxu0 %v178
    %212 = vmatprep.subr.mxu0 0.0
    %213 = vmatpush1.msra.mxu0 %v179
    %214 = vmatprep.subr.mxu0 0.0
    %215 = vmatpush1.msra.mxu0 %v180
    %216 = vmatprep.subr.mxu0 0.0
    %217 = vmatpush1.msra.mxu0 %v181
    %218 = vmatprep.subr.mxu0 0.0
    %219 = vmatpush1.msra.mxu0 %v182
    %220 = vmatprep.subr.mxu0 0.0
    %221 = vmatpush1.msra.mxu0 %v183
    %222 = vmatprep.subr.mxu0 0.0
    %223 = vmatpush1.msra.mxu0 %v184
    %224 = vmatprep.subr.mxu0 0.0
    %225 = vmatpush1.msra.mxu0 0.0
    %226 = vmatprep.subr.mxu0 0.0
    %227 = vmatpush1.msra.mxu0 0.0
    %228 = vmatprep.subr.mxu0 0.0
    %229 = vmatpush1.msra.mxu0 0.0
    %230 = vmatprep.subr.mxu0 0.0
    %231 = vmatpush1.msra.mxu0 0.0
    %232 = vmatprep.subr.mxu0 0.0
    %233 = vmatpush1.msra.mxu0 0.0
    %234 = vmatprep.subr.mxu0 0.0
    %235 = vmatpush1.msra.mxu0 0.0
    %236 = vmatprep.subr.mxu0 0.0
    %237 = vmatpush1.msra.mxu0 0.0
    %238 = vmatprep.subr.mxu0 0.0
    %239 = vmatpush1.msra.mxu0 0.0
    %240 = vmatprep.subr.mxu0 0.0
    %241 = vmatpush1.msra.mxu0 0.0
    %242 = vmatprep.subr.mxu0 0.0
    %243 = vmatpush1.msra.mxu0 0.0
    %244 = vmatprep.subr.mxu0 0.0
    %245 = vmatpush1.msra.mxu0 0.0
    %246 = vmatprep.subr.mxu0 0.0
    %247 = vmatpush1.msra.mxu0 0.0
    %248 = vmatprep.subr.mxu0 0.0
    %249 = vmatpush1.msra.mxu0 0.0
    %250 = vmatprep.subr.mxu0 0.0
    %251 = vmatpush1.msra.mxu0 0.0
    %252 = vmatprep.subr.mxu0 0.0
    %253 = vmatpush1.msra.mxu0 0.0
    %254 = vmatprep.subr.mxu0 0.0
    %255 = vmatpush1.msra.mxu0 0.0
    %256 = vmatprep.mubr.f32.mxu0 0.0
    %257 = vmatmul.mubr.f32.gmra.mrb[0].mxu0 %v168
    %v258 = vpop.f32.mrb[0].mxu0
    %v259 = vadd.f32 %v190, %v258
    %v260 = vpop.f32.mrb[0].mxu0
    %261 = vdwg.mxu0
    %v262 = vtanh.pop %v259
    %v263 = vld [vmem:[#allocation8] sm:$0xff]
    %v264 = vld [vmem:[#allocation8 + $0x8] sm:$0xff]
    %v265 = vld [vmem:[#allocation8 + $0x10] sm:$0xff]
    %v266 = vld [vmem:[#allocation8 + $0x18] sm:$0xff]
    %v267 = vld [vmem:[#allocation8 + $0x20] sm:$0xff]
    %v268 = vld [vmem:[#allocation8 + $0x28] sm:$0xff]
    %v269 = vld [vmem:[#allocation8 + $0x30] sm:$0xff]
    %v270 = vld [vmem:[#allocation8 + $0x38] sm:$0xff]
    %v271 = vld [vmem:[#allocation8 + $0x40] sm:$0xff]
    %v272 = vld [vmem:[#allocation8 + $0x48] sm:$0xff]
    %v273 = vld [vmem:[#allocation8 + $0x50] sm:$0xff]
    %v274 = vld [vmem:[#allocation8 + $0x58] sm:$0xff]
    %v275 = vld [vmem:[#allocation8 + $0x60] sm:$0xff]
    %v276 = vld [vmem:[#allocation8 + $0x68] sm:$0xff]
    %v277 = vld [vmem:[#allocation8 + $0x70] sm:$0xff]
    %v278 = vld [vmem:[#allocation8 + $0x78] sm:$0xff]
    %v279 = vld [vmem:[%s6] sm:$0x1]
    %v281 = vlaneseq
    %v282 = vshrl.u32 %v281, 7
    %v283 = vsub.s32 0, %v282
    %v284 = vrot.slane %v279, %v283
    %286 = vmatprep.subr.mxu0 0.0
    %287 = vmatpush1.msra.mxu0 %v263
    %288 = vmatprep.subr.mxu0 0.0
    %289 = vmatpush1.msra.mxu0 %v264
    %290 = vmatprep.subr.mxu0 0.0
    %291 = vmatpush1.msra.mxu0 %v265
    %292 = vmatprep.subr.mxu0 0.0
    %293 = vmatpush1.msra.mxu0 %v266
    %294 = vmatprep.subr.mxu0 0.0
    %295 = vmatpush1.msra.mxu0 %v267
    %296 = vmatprep.subr.mxu0 0.0
    %297 = vmatpush1.msra.mxu0 %v268
    %298 = vmatprep.subr.mxu0 0.0
    %299 = vmatpush1.msra.mxu0 %v269
    %300 = vmatprep.subr.mxu0 0.0
    %301 = vmatpush1.msra.mxu0 %v270
    %302 = vmatprep.subr.mxu0 0.0
    %303 = vmatpush1.msra.mxu0 %v271
    %304 = vmatprep.subr.mxu0 0.0
    %305 = vmatpush1.msra.mxu0 %v272
    %306 = vmatprep.subr.mxu0 0.0
    %307 = vmatpush1.msra.mxu0 %v273
    %308 = vmatprep.subr.mxu0 0.0
    %309 = vmatpush1.msra.mxu0 %v274
    %310 = vmatprep.subr.mxu0 0.0
    %311 = vmatpush1.msra.mxu0 %v275
    %312 = vmatprep.subr.mxu0 0.0
    %313 = vmatpush1.msra.mxu0 %v276
    %314 = vmatprep.subr.mxu0 0.0
    %315 = vmatpush1.msra.mxu0 %v277
    %316 = vmatprep.subr.mxu0 0.0
    %317 = vmatpush1.msra.mxu0 %v278
    %318 = vmatprep.subr.mxu0 0.0
    %319 = vmatpush1.msra.mxu0 0.0
    %320 = vmatprep.subr.mxu0 0.0
    %321 = vmatpush1.msra.mxu0 0.0
    %322 = vmatprep.subr.mxu0 0.0
    %323 = vmatpush1.msra.mxu0 0.0
    %324 = vmatprep.subr.mxu0 0.0
    %325 = vmatpush1.msra.mxu0 0.0
    %326 = vmatprep.subr.mxu0 0.0
    %327 = vmatpush1.msra.mxu0 0.0
    %328 = vmatprep.subr.mxu0 0.0
    %329 = vmatpush1.msra.mxu0 0.0
    %330 = vmatprep.subr.mxu0 0.0
    %331 = vmatpush1.msra.mxu0 0.0
    %332 = vmatprep.subr.mxu0 0.0
    %333 = vmatpush1.msra.mxu0 0.0
    %334 = vmatprep.subr.mxu0 0.0
    %335 = vmatpush1.msra.mxu0 0.0
    %336 = vmatprep.subr.mxu0 0.0
    %337 = vmatpush1.msra.mxu0 0.0
    %338 = vmatprep.subr.mxu0 0.0
    %339 = vmatpush1.msra.mxu0 0.0
    %340 = vmatprep.subr.mxu0 0.0
    %341 = vmatpush1.msra.mxu0 0.0
    %342 = vmatprep.subr.mxu0 0.0
    %343 = vmatpush1.msra.mxu0 0.0
    %344 = vmatprep.subr.mxu0 0.0
    %345 = vmatpush1.msra.mxu0 0.0
    %346 = vmatprep.subr.mxu0 0.0
    %347 = vmatpush1.msra.mxu0 0.0
    %348 = vmatprep.subr.mxu0 0.0
    %349 = vmatpush1.msra.mxu0 0.0
    %350 = vmatprep.mubr.f32.mxu0 0.0
    %351 = vmatmul.mubr.f32.gmra.mrb[0].mxu0 %v262
    %v352 = vpop.f32.mrb[0].mxu0
    %v353 = vadd.f32 %v284, %v352
    %v354 = vpop.f32.mrb[0].mxu0
    %355 = vdwg.mxu0
    %vm356 = vcmask 64512
    %357 = vst.msk [vmem:[#allocation10] sm:$0xff] %vm356, %v353
    %359 = vrot.lane.b32.xlu0 %v353, 120
    %v360 = vpop.permute.xlu0 %359
    %vm362 = vcmask 7168
    %363 = vst.msk [vmem:[%s8] sm:$0xff] %vm362, %v360
    // Predicated region
    $region46: #{tpu_custom_call.1} parent=1 // pred_check
      _
    $region47: #{tpu_custom_call.1} parent=1 // pred_check_branch
      %365 = sbr.rel (0) target = $region49
    $region48: #{tpu_custom_call.1} parent=1 // pred_region
      %s367 = ssub.s32 128, 128
      %368 = vsyncadd [#allocation4], %s367
      %s370 = sshll.u32 [#allocation10], 4
      %s371 = int_to_ptr.vmem [resolvable:$true] %s370
      %373 = dma.vmem_to_hbm [thread:$0]  %s371, 128, %s7, [#allocation4]
    $region49: #{tpu_custom_call.1} parent=1 // pred_fallthru
      _
    // Predicated region
    $region50: #{tpu_custom_call.1} parent=1 // pred_check
      _
    $region51: #{tpu_custom_call.1} parent=1 // pred_check_branch
      %375 = sbr.rel (0) target = $region53
    $region52: #{tpu_custom_call.1} parent=1 // pred_region
      _
    $region53: #{tpu_custom_call.1} parent=1 // pred_fallthru
      _
    // Predicated region
    $region54: #{tpu_custom_call.1} parent=1 // pred_check
      _
    $region55: #{tpu_custom_call.1} parent=1 // pred_check_branch
      %377 = sbr.rel (0) target = $region57
    $region56: #{tpu_custom_call.1} parent=1 // pred_region
      %378 = dma.done [#allocation4], 128
    $region57: #{tpu_custom_call.1} parent=1 // pred_fallthru
      _
    // Predicated region
    $region58: #{tpu_custom_call.1} parent=1 // pred_check
      _
    $region59: #{tpu_custom_call.1} parent=1 // pred_check_branch
      %380 = sbr.rel (0) target = $region61
    $region60: #{tpu_custom_call.1} parent=1 // pred_region
      _
    $region61: #{tpu_custom_call.1} parent=1 // pred_fallthru
      _
    %381 = vsyncpa [#allocation3], 1
    %382 = vsyncpa [#allocation6], 1
    %383 = vsyncpa [#allocation9], 1
    %384 = vsyncpa [#allocation4], 1

</llo_original>
